<compile_context>
chip_gen: v7x
topology: tpu7x:2x2x1
jax: 0.10.0
libtpu: 0.0.40
codegen_flags: <defaults>
</compile_context>

<pallas_src>
import functools

import jax
import jax.numpy as jnp
from jax.experimental import pallas as pl
from jax.experimental.pallas import tpu as pltpu

_LANE = 128
_SUBLANE = 8
_MAX_BLOCK_ROWS = 2048          # 2048 x 128 x 4B = 1 MiB per f32 operand block


def _shift_left_one_lane(x):
    """y[:, i] = x[:, i + 1]; the wrapped last column is never consumed."""
    return jnp.concatenate([x[:, 1:], x[:, :1]], axis=1)


def _interleaved_loss(inp, tgt, task):
    """Per-lane loss for lane-interleaved [l0, r0, l1, r1, ...] tiles.

    Valid at even lanes (lane 2k holds the loss of box k); odd lanes hold
    don't-care values that callers must mask or ignore.
    """
    inp = inp.astype(jnp.float32)
    tgt = tgt.astype(jnp.float32)
    mx = jnp.maximum(inp, tgt)              # even lane: max_left ; odd: max_right
    mn = jnp.minimum(inp, tgt)              # even lane: min_left ; odd: min_right
    mx_r = _shift_left_one_lane(mx)         # even lane: max_right
    mn_r = _shift_left_one_lane(mn)         # even lane: min_right
    num = mn_r - mx                         # min_right - max_left
    den = mx_r - mn + 1e-30                 # max_right - min_left + eps
    iou = num / den
    if task == "iou":
        iou = jnp.where(iou < 0.0, 0.0, iou)
    return 1.0 - iou


def _giou_none_kernel(in_ref, tg_ref, out_ref, *, task):
    loss = _interleaved_loss(in_ref[...], tg_ref[...], task)
    out_ref[...] = loss.astype(out_ref.dtype)


def _giou_reduce_kernel(in_ref, tg_ref, out_ref, *, task, n_elems, block_elems):
    loss = _interleaved_loss(in_ref[...], tg_ref[...], task)      # (R, 128)
    lane = jax.lax.broadcasted_iota(jnp.int32, loss.shape, 1)
    row = jax.lax.broadcasted_iota(jnp.int32, loss.shape, 0)
    pos = pl.program_id(0) * block_elems + row * _LANE + lane     # flat element idx
    valid = jnp.logical_and((lane & 1) == 0, pos < n_elems)       # even lane & in-range
    loss = jnp.where(valid, loss, 0.0)
    # One lane-wise partial sum per block (sublane reduce only; final reduce in XLA).
    out_ref[0] = jnp.sum(loss, axis=0, keepdims=True)


def _plan(n_elems):
    """Choose (padded_elems, block_rows, n_blocks) for a flat element count.

    padded_elems == n_elems whenever the layout allows it (no wrapper copy).
    """
    if n_elems % _LANE == 0:
        rows = n_elems // _LANE
        if rows <= _MAX_BLOCK_ROWS:
            # Prefer two blocks when there is enough data so a v7x megacore can
            # shard the grid; the extra step is noise (~0.35us) on 1-TC chips.
            if rows >= 64 and rows % (2 * _SUBLANE) == 0:
                return n_elems, rows // 2, 2
            return n_elems, rows, 1
        if rows % _SUBLANE == 0:
            # Largest divisor of `rows` that is a multiple of 8 and big enough
            # to amortize per-step overhead; otherwise fall through to padding.
            for block_rows in range(_MAX_BLOCK_ROWS, 255, -_SUBLANE):
                if rows % block_rows == 0:
                    return n_elems, block_rows, rows // block_rows
    # Fallback: pad the flat arrays (one contiguous streaming copy in XLA).
    rows = pl.cdiv(n_elems, _LANE)
    if rows <= _MAX_BLOCK_ROWS:
        if rows >= 64:
            rows = pl.cdiv(rows, 2 * _SUBLANE) * (2 * _SUBLANE)
            block_rows, n_blocks = rows // 2, 2
        else:
            rows = pl.cdiv(rows, _SUBLANE) * _SUBLANE
            block_rows, n_blocks = rows, 1
    else:
        n_blocks = pl.cdiv(rows, _MAX_BLOCK_ROWS)
        block_rows = pl.cdiv(pl.cdiv(rows, n_blocks), _SUBLANE) * _SUBLANE
        rows = n_blocks * block_rows
    return rows * _LANE, block_rows, n_blocks


def _as_lane_rows(x, dtype, padded_elems):
    """Row-major flatten to (padded_elems // 128, 128); copy-free when no pad
    or dtype change is required."""
    flat = x.astype(dtype).reshape(-1)
    if flat.shape[0] != padded_elems:
        flat = jnp.pad(flat, (0, padded_elems - flat.shape[0]))
    return flat.reshape(padded_elems // _LANE, _LANE)


def giou_loss(inputs, targets, task="giou", reduction="none"):
    """Pallas TPU implementation of GiouLoss.forward for (N, 2) interval boxes."""
    assert inputs.shape == targets.shape and inputs.shape[-1] == 2
    n = inputs.shape[0]
    n_elems = 2 * n

    dtype = jnp.promote_types(inputs.dtype, targets.dtype)
    if not jnp.issubdtype(dtype, jnp.floating):
        dtype = jnp.float32

    padded_elems, block_rows, n_blocks = _plan(n_elems)
    rows = padded_elems // _LANE
    in_rows = _as_lane_rows(inputs, dtype, padded_elems)
    tg_rows = _as_lane_rows(targets, dtype, padded_elems)

    in_spec = pl.BlockSpec((block_rows, _LANE), lambda i: (i, 0))
    compiler_params = pltpu.CompilerParams(
        dimension_semantics=("parallel",),
        allow_input_fusion=[True, True],
        vmem_limit_bytes=32 * 1024 * 1024,
    )

    if reduction in ("mean", "sum"):
        kernel = functools.partial(
            _giou_reduce_kernel, task=task, n_elems=n_elems,
            block_elems=block_rows * _LANE)
        partials = pl.pallas_call(
            kernel,
            out_shape=jax.ShapeDtypeStruct((n_blocks, 1, _LANE), jnp.float32),
            grid=(n_blocks,),
            in_specs=[in_spec, in_spec],
            out_specs=pl.BlockSpec((1, 1, _LANE), lambda i: (i, 0, 0)),
            compiler_params=compiler_params,
        )(in_rows, tg_rows)
        total = jnp.sum(partials)
        return total / n if reduction == "mean" else total

    kernel = functools.partial(_giou_none_kernel, task=task)
    out = pl.pallas_call(
        kernel,
        out_shape=jax.ShapeDtypeStruct((rows, _LANE), dtype),
        grid=(n_blocks,),
        in_specs=[in_spec, in_spec],
        out_specs=pl.BlockSpec((block_rows, _LANE), lambda i: (i, 0)),
        compiler_params=compiler_params,
    )(in_rows, tg_rows)
    # Per-box loss sits at even flat positions (lane 2k of the padded stream).
    return out.reshape(-1, 2)[:n, 0]


def _reference(inputs, targets, task="giou", reduction="none"):
    inputs = inputs.astype(jnp.float32)
    targets = targets.astype(jnp.float32)
    max_left = jnp.maximum(inputs[:, 0], targets[:, 0])
    min_right = jnp.minimum(inputs[:, 1], targets[:, 1])
    max_right = jnp.maximum(inputs[:, 1], targets[:, 1])
    min_left = jnp.minimum(inputs[:, 0], targets[:, 0])
    iou = (min_right - max_left) / (max_right - min_left + 1e-30)
    if task == "iou":
        iou = jnp.where(iou < 0.0, 0.0, iou)
    loss = 1.0 - iou
    if reduction == "mean":
        return jnp.mean(loss)
    if reduction == "sum":
        return jnp.sum(loss)
    return loss


def _make_boxes(key, n):
    k1, k2, k3, k4 = jax.random.split(key, 4)
    in_left = jax.random.uniform(k1, (n,), jnp.float32, 0.0, 5.0)
    in_right = in_left + jax.random.uniform(k2, (n,), jnp.float32, 0.5, 5.0)
    tg_left = jax.random.uniform(k3, (n,), jnp.float32, 0.0, 5.0)
    tg_right = tg_left + jax.random.uniform(k4, (n,), jnp.float32, 0.5, 5.0)
    inputs = jnp.stack([in_left, in_right], axis=1)    # (n, 2)
    targets = jnp.stack([tg_left, tg_right], axis=1)   # (n, 2)
    return inputs, targets


if __name__ == "__main__":
    key = jax.random.PRNGKey(0)
    k_small, k_mid, k_big = jax.random.split(key, 3)

    # Small case (padded, single block).
    N = 8
    inputs, targets = _make_boxes(k_small, N)
    loss = jax.block_until_ready(giou_loss(inputs, targets, "giou", "none"))
    assert loss.shape == (N,)
    assert jnp.allclose(loss, _reference(inputs, targets, "giou", "none"),
                        atol=1e-5, rtol=1e-5)
    loss_iou = jax.block_until_ready(giou_loss(inputs, targets, "iou", "none"))
    assert jnp.allclose(loss_iou, _reference(inputs, targets, "iou", "none"),
                        atol=1e-5, rtol=1e-5)
    for red in ("mean", "sum"):
        got = jax.block_until_ready(giou_loss(inputs, targets, "giou", red))
        want = _reference(inputs, targets, "giou", red)
        assert jnp.allclose(got, want, atol=1e-4, rtol=1e-5)

    # Unaligned case: padded flat inputs, fused lane-wise partial sum.
    N2 = 3000
    inputs2, targets2 = _make_boxes(k_mid, N2)
    loss2 = jax.block_until_ready(giou_loss(inputs2, targets2, "giou", "none"))
    assert loss2.shape == (N2,)
    assert jnp.allclose(loss2, _reference(inputs2, targets2, "giou", "none"),
                        atol=1e-5, rtol=1e-5)
    got2 = jax.block_until_ready(giou_loss(inputs2, targets2, "giou", "sum"))
    want2 = _reference(inputs2, targets2, "giou", "sum")
    assert jnp.allclose(got2, want2, atol=1e-3, rtol=1e-5)

    # Aligned case: zero-copy inputs, 2 grid blocks, parallel partial sums.
    N3 = 8192
    inputs3, targets3 = _make_boxes(k_big, N3)
    loss3 = jax.block_until_ready(giou_loss(inputs3, targets3, "giou", "none"))
    assert loss3.shape == (N3,)
    assert jnp.allclose(loss3, _reference(inputs3, targets3, "giou", "none"),
                        atol=1e-5, rtol=1e-5)
    for red in ("mean", "sum"):
        got3 = jax.block_until_ready(giou_loss(inputs3, targets3, "giou", red))
        want3 = _reference(inputs3, targets3, "giou", red)
        assert jnp.allclose(got3, want3, atol=1e-2, rtol=1e-5)

    # bf16 inputs: bf16 DMA in, bf16 per-box loss out.
    inputs_bf = inputs3[:128].astype(jnp.bfloat16)
    targets_bf = targets3[:128].astype(jnp.bfloat16)
    loss_bf = jax.block_until_ready(
        giou_loss(inputs_bf, targets_bf, "giou", "none"))
    assert loss_bf.dtype == jnp.bfloat16
    assert jnp.allclose(loss_bf.astype(jnp.float32),
                        _reference(inputs_bf, targets_bf, "giou", "none"),
                        atol=5e-2, rtol=5e-2)

    print("KERNEL_OK")
</pallas_src>

<mosaic_0001>
module attributes {stable_mosaic.version = 11 : i64} {
  func.func @_giou_none_kernel(%arg0: i32, %arg1: memref<8x128xf32, #tpu.memory_space<vmem>>, %arg2: memref<8x128xf32, #tpu.memory_space<vmem>>, %arg3: memref<8x128xf32, #tpu.memory_space<vmem>>) attributes {dimension_semantics = [#tpu.dimension_semantics<parallel>], iteration_bounds = array<i64: 1>, scalar_prefetch = 0 : i64, scratch_operands = 0 : i64, tpu.core_type = #tpu.core_type<tc>, window_params = [{transform_indices = @transform_0, window_bounds = array<i64: 8, 128>}, {transform_indices = @transform_1, window_bounds = array<i64: 8, 128>}, {transform_indices = @transform_2, window_bounds = array<i64: 8, 128>}]} {
    %c0 = arith.constant 0 : index
    %c0_0 = arith.constant 0 : index
    %0 = vector.load %arg1[%c0, %c0_0] : memref<8x128xf32, #tpu.memory_space<vmem>>, vector<8x128xf32>
    %c0_1 = arith.constant 0 : index
    %c0_2 = arith.constant 0 : index
    %1 = vector.load %arg2[%c0_1, %c0_2] : memref<8x128xf32, #tpu.memory_space<vmem>>, vector<8x128xf32>
    %2 = arith.maximumf %0, %1 : vector<8x128xf32>
    %3 = arith.minimumf %0, %1 : vector<8x128xf32>
    %4 = vector.extract_strided_slice %2 {offsets = [0, 1], sizes = [8, 127], strides = [1, 1]} : vector<8x128xf32> to vector<8x127xf32>
    %5 = vector.extract_strided_slice %2 {offsets = [0, 0], sizes = [8, 1], strides = [1, 1]} : vector<8x128xf32> to vector<8x1xf32>
    %6 = tpu.concatenate %4, %5 in 1 : vector<8x127xf32>, vector<8x1xf32> -> vector<8x128xf32>
    %7 = vector.extract_strided_slice %3 {offsets = [0, 1], sizes = [8, 127], strides = [1, 1]} : vector<8x128xf32> to vector<8x127xf32>
    %8 = vector.extract_strided_slice %3 {offsets = [0, 0], sizes = [8, 1], strides = [1, 1]} : vector<8x128xf32> to vector<8x1xf32>
    %9 = tpu.concatenate %7, %8 in 1 : vector<8x127xf32>, vector<8x1xf32> -> vector<8x128xf32>
    %10 = arith.subf %9, %2 : vector<8x128xf32>
    %11 = arith.subf %6, %3 : vector<8x128xf32>
    %cst = arith.constant 1.000000e-30 : f32
    %12 = vector.broadcast %cst : f32 to vector<8x128xf32>
    %13 = arith.addf %11, %12 : vector<8x128xf32>
    %14 = arith.divf %10, %13 : vector<8x128xf32>
    %cst_3 = arith.constant 1.000000e+00 : f32
    %15 = vector.broadcast %cst_3 : f32 to vector<8x128xf32>
    %16 = arith.subf %15, %14 : vector<8x128xf32>
    %c0_4 = arith.constant 0 : index
    %c0_5 = arith.constant 0 : index
    %17 = vector.load %arg3[%c0_4, %c0_5] : memref<8x128xf32, #tpu.memory_space<vmem>>, vector<8x128xf32>
    tpu.vector_store %arg3[%c0_4, %c0_5], %16 {strides = array<i32>} : memref<8x128xf32, #tpu.memory_space<vmem>>, vector<8x128xf32>,
    return
  }
  func.func @transform_0(%arg0: i32) -> (i32, i32) {
    %c0_i32 = arith.constant 0 : i32
    %c0_i32_0 = arith.constant 0 : i32
    return %arg0, %c0_i32 : i32, i32
  }
  func.func @transform_1(%arg0: i32) -> (i32, i32) {
    %c0_i32 = arith.constant 0 : i32
    %c0_i32_0 = arith.constant 0 : i32
    return %arg0, %c0_i32 : i32, i32
  }
  func.func @transform_2(%arg0: i32) -> (i32, i32) {
    %c0_i32 = arith.constant 0 : i32
    %c0_i32_0 = arith.constant 0 : i32
    return %arg0, %c0_i32 : i32, i32
  }
}

</mosaic_0001>

<llo_original>
// kernel: tpu_custom_call.1
$region0: #{tpu_custom_call.1}
  #allocation0 [shape = 'u32[]', space=smem, size = 0x4, offset = 0x4, fixed_abs, tag = 'smem constant byte address 0x4 - core index']
  #allocation1 [shape = 'u32[144,128]{1,0:T(1,128)}', space=vmem, size = 0x12000, scoped, tag = 'internal scratch']
  %s0 = inlined_call_operand.hbm [shape: f32[8,128], index: 0, kind: input, shape index: {}]
  %s1 = inlined_call_operand.hbm [shape: f32[8,128], index: 1, kind: input, shape index: {}]
  %s2 = inlined_call_operand.hbm [shape: f32[8,128], index: 2, kind: output, shape index: {}]
  %s3 = sld [smem:[#allocation0]]
  $region26: #{tpu_custom_call.1} parent=0
    _
  %s5 = ssub.s32 1, %s3
  %s6 = scalar_select 0, %s5, %s3
  $region1: #{tpu_custom_call.1} parent=0
    #allocation2 [shape = 'u8[4096]{0}', space=vmem, size = 0x1000, scoped, tag = 'input window, operand 0, single buffered']
    #allocation3 [shape = 's32[1]{0}', space=sflag, size = 0x4, scoped, tag = 'scoped memory for tpu_custom_call.1']
    #allocation4 [shape = 's32[1]{0}', space=sflag, size = 0x4, scoped, tag = 'scoped memory for tpu_custom_call.1']
    #allocation5 [shape = 'u8[4096]{0}', space=vmem, size = 0x1000, scoped, tag = 'input window, operand 1, single buffered']
    #allocation6 [shape = 's32[1]{0}', space=sflag, size = 0x4, scoped, tag = 'scoped memory for tpu_custom_call.1']
    #allocation7 [shape = 'u8[4096]{0}', space=vmem, size = 0x1000, scoped, tag = 'output window, operand 0, single buffered']
    %7 = vsyncpa [#allocation3], 0
    %8 = vsyncpa [#allocation6], 0
    %9 = vsyncpa [#allocation4], 0
    // Predicated region
    $region2: #{tpu_custom_call.1} parent=1 // pred_check
      _
    $region3: #{tpu_custom_call.1} parent=1 // pred_check_branch
      %11 = sbr.rel (0) target = $region5
    $region4: #{tpu_custom_call.1} parent=1 // pred_region
      %s13 = ssub.s32 128, 128
      %14 = vsyncadd [#allocation3], %s13
      %s16 = sshll.u32 [#allocation2], 4
      %s17 = int_to_ptr.vmem [resolvable:$true] %s16
      %19 = dma.hbm_to_vmem [thread:$0]  %s0, 128, %s17, [#allocation3]
    $region5: #{tpu_custom_call.1} parent=1 // pred_fallthru
      _
    // Predicated region
    $region6: #{tpu_custom_call.1} parent=1 // pred_check
      _
    $region7: #{tpu_custom_call.1} parent=1 // pred_check_branch
      %21 = sbr.rel (0) target = $region9
    $region8: #{tpu_custom_call.1} parent=1 // pred_region
      %s23 = ssub.s32 128, 128
      %24 = vsyncadd [#allocation6], %s23
      %s26 = sshll.u32 [#allocation5], 4
      %s27 = int_to_ptr.vmem [resolvable:$true] %s26
      %29 = dma.hbm_to_vmem [thread:$0]  %s1, 128, %s27, [#allocation6]
    $region9: #{tpu_custom_call.1} parent=1 // pred_fallthru
      _
    // Predicated region
    $region10: #{tpu_custom_call.1} parent=1 // pred_check
      _
    $region11: #{tpu_custom_call.1} parent=1 // pred_check_branch
      %31 = sbr.rel (0) target = $region13
    $region12: #{tpu_custom_call.1} parent=1 // pred_region
      %32 = dma.done [#allocation3], 128
    $region13: #{tpu_custom_call.1} parent=1 // pred_fallthru
      _
    // Predicated region
    $region14: #{tpu_custom_call.1} parent=1 // pred_check
      _
    $region15: #{tpu_custom_call.1} parent=1 // pred_check_branch
      %34 = sbr.rel (0) target = $region17
    $region16: #{tpu_custom_call.1} parent=1 // pred_region
      %35 = dma.done [#allocation6], 128
    $region17: #{tpu_custom_call.1} parent=1 // pred_fallthru
      _
    %v36 = vld [vmem:[#allocation2] sm:$0xff]
    %v37 = vld [vmem:[#allocation5] sm:$0xff]
    %v38 = vmax.f32 %v36, %v37
    %v39 = vmin.f32 %v36, %v37
    %41 = vrot.lane.b32.xlu0 %v38, 127
    %v42 = vpop.permute.xlu0 %41
    %45 = vrot.lane.b32.xlu0 %v39, 127
    %v46 = vpop.permute.xlu0 %45
    %v48 = vsub.f32 %v46, %v38
    %v49 = vsub.f32 %v42, %v39
    %v50 = vadd.f32 %v49, 1e-30
    %v51 = vrcp.pop %v50
    %v52 = vmul.f32 %v48, %v51
    %v53 = vsub.f32 1.0, %v52
    %54 = vst [vmem:[#allocation7] sm:$0xff] %v53
    // Predicated region
    $region18: #{tpu_custom_call.1} parent=1 // pred_check
      _
    $region19: #{tpu_custom_call.1} parent=1 // pred_check_branch
      %56 = sbr.rel (0) target = $region21
    $region20: #{tpu_custom_call.1} parent=1 // pred_region
      %s58 = ssub.s32 128, 128
      %59 = vsyncadd [#allocation4], %s58
      %s61 = sshll.u32 [#allocation7], 4
      %s62 = int_to_ptr.vmem [resolvable:$true] %s61
      %64 = dma.vmem_to_hbm [thread:$0]  %s62, 128, %s2, [#allocation4]
    $region21: #{tpu_custom_call.1} parent=1 // pred_fallthru
      _
    // Predicated region
    $region22: #{tpu_custom_call.1} parent=1 // pred_check
      _
    $region23: #{tpu_custom_call.1} parent=1 // pred_check_branch
      %66 = sbr.rel (0) target = $region25
    $region24: #{tpu_custom_call.1} parent=1 // pred_region
      %67 = dma.done [#allocation4], 128
    $region25: #{tpu_custom_call.1} parent=1 // pred_fallthru
      _
    %68 = vsyncpa [#allocation3], 1
    %69 = vsyncpa [#allocation6], 1
    %70 = vsyncpa [#allocation4], 1

</llo_original>
